<compile_context>
chip_gen: v6e
topology: v6e:2x2x1
jax: 0.10.0
libtpu: 0.0.40
codegen_flags: <defaults>
</compile_context>

<pallas_src>
import functools

import jax
import jax.numpy as jnp
from jax.experimental import pallas as pl
from jax.experimental.pallas import tpu as pltpu


def _round_up(x: int, m: int) -> int:
    return ((x + m - 1) // m) * m


def _vmem_capacity_bytes() -> int:
    """Physical VMEM per TensorCore (128 MiB on v5e/v6e, 64 MiB on v7x)."""
    try:
        v = int(pltpu.get_tpu_info().vmem_capacity_bytes)
        if v >= 16 * 1024 * 1024:
            return v
    except Exception:
        pass
    return 64 * 1024 * 1024  # conservative (v7x-sized) fallback


def _divisor_tiles(total: int, lane: int):
    """Tile sizes (multiples of `lane`, <= 4096) that evenly divide `total`."""
    cands = {t for t in range(lane, min(total, 4096) + 1, lane) if total % t == 0}
    if total <= 8192:
        cands.add(total)
    return sorted(cands, reverse=True)


def _pick_config(B, Kp, Np0, lane_n, in_size, out_size, out_is_f32,
                 vmem_bytes, k_block=None):
    """Choose execution mode + tile sizes from the per-generation VMEM budget."""
    budget = int(0.55 * vmem_bytes)          # headroom for Mosaic-internal scratch
    sub = 8 if in_size >= 4 else 16
    tm = min(_round_up(B, sub), 512)
    Bp = _round_up(B, tm)
    n_cands = _divisor_tiles(Np0, lane_n)
    k_cands = _divisor_tiles(Kp, 128)

    def single_need(tn):
        return (2 * tm * Kp * in_size        # x tiles (double-buffered)
                + 2 * Kp * tn * in_size      # weight panel
                + 2 * tn * 4                 # f32 bias
                + 2 * tm * tn * out_size)    # output tiles

    if k_block is None:
        for tn in n_cands:
            if single_need(tn) <= budget:
                # Megacore: with a single M block try to keep >= 2 N blocks so
                # both TensorCores (v7x) get work.
                if Bp == tm and Np0 // tn < 2:
                    for tn2 in n_cands:
                        if tn2 < tn and Np0 // tn2 >= 2 and single_need(tn2) <= budget:
                            tn = tn2
                            break
                return dict(mode="single", tm=tm, tn=tn, tk=Kp, Bp=Bp,
                            wbuf=2, need=single_need(tn))
    else:
        assert Kp % k_block == 0, "k_block must divide the padded K"
        k_cands = [k_block]

    def tiled_need(tn, tk, wbuf):
        return (2 * tm * tk * in_size
                + wbuf * tk * tn * in_size
                + 2 * tn * 4
                + 2 * tm * tn * out_size
                + (0 if out_is_f32 else tm * tn * 4))

    best = None
    for tn in n_cands:
        for tk in k_cands:
            wbuf = 3 if (tm <= 64 and Kp // tk >= 3) else 2
            need = tiled_need(tn, tk, wbuf)
            if need > budget:
                continue
            score = (tn * tk, tn)
            if best is None or score > best[0]:
                best = (score, dict(mode="ktiled", tm=tm, tn=tn, tk=tk, Bp=Bp,
                                    wbuf=wbuf, need=need))
    if best is not None:
        return best[1]
    # Nothing fits the nominal budget: smallest tiles; the explicit vmem_limit
    # below still gives Mosaic room to compile.
    tn, tk = n_cands[-1], k_cands[-1]
    return dict(mode="ktiled", tm=tm, tn=tn, tk=tk, Bp=Bp, wbuf=2,
                need=tiled_need(tn, tk, 2))


# ----------------------------- kernel bodies ------------------------------ #

def _fc_kernel_single(x_ref, w_ref, b_ref, o_ref, *, relu: bool):
    # x: (tm, Kp)   w: (Kp, tn)   b: (1, tn) f32   o: (tm, tn)
    out = jnp.dot(x_ref[...], w_ref[...], preferred_element_type=jnp.float32)
    out = out + b_ref[...]
    if relu:
        out = jnp.maximum(out, 0.0)
    o_ref[...] = out.astype(o_ref.dtype)


def _fc_kernel_ktiled_f32(x_ref, w_ref, b_ref, o_ref, *, relu: bool):
    # f32 output: accumulate directly into the resident output tile (no scratch).
    k = pl.program_id(2)

    @pl.when(k == 0)
    def _():
        o_ref[...] = jnp.zeros_like(o_ref)

    o_ref[...] += jnp.dot(x_ref[...], w_ref[...],
                          preferred_element_type=jnp.float32)

    @pl.when(k == pl.num_programs(2) - 1)
    def _():
        out = o_ref[...] + b_ref[...]
        if relu:
            out = jnp.maximum(out, 0.0)
        o_ref[...] = out


def _fc_kernel_ktiled_acc(x_ref, w_ref, b_ref, o_ref, acc_ref, *, relu: bool):
    # Low-precision output: f32 VMEM accumulator, cast only in the epilogue.
    k = pl.program_id(2)

    @pl.when(k == 0)
    def _():
        acc_ref[...] = jnp.zeros_like(acc_ref)

    acc_ref[...] += jnp.dot(x_ref[...], w_ref[...],
                            preferred_element_type=jnp.float32)

    @pl.when(k == pl.num_programs(2) - 1)
    def _():
        out = acc_ref[...] + b_ref[...]
        if relu:
            out = jnp.maximum(out, 0.0)
        o_ref[...] = out.astype(o_ref.dtype)


# ------------------------------ host wrapper ------------------------------ #

def _fc_apply(x, w_t, b2d, N, K, *, relu, compute_dtype, lane_n, k_block):
    B, K_in = x.shape
    assert K_in == K, "in_features mismatch"
    out_dtype = x.dtype
    if compute_dtype is not None and x.dtype != compute_dtype:
        x = x.astype(compute_dtype)

    Kp, Np0 = w_t.shape
    in_size = jnp.dtype(x.dtype).itemsize
    out_size = jnp.dtype(out_dtype).itemsize
    out_is_f32 = jnp.dtype(out_dtype) == jnp.float32
    vmem_bytes = _vmem_capacity_bytes()

    cfg = _pick_config(B, Kp, Np0, lane_n, in_size, out_size, out_is_f32,
                       vmem_bytes, k_block=k_block)
    tm, tn, tk, Bp = cfg["tm"], cfg["tn"], cfg["tk"], cfg["Bp"]
    n_i, n_j = Bp // tm, Np0 // tn

    # Only x (activations) may need a per-call pad; weight/bias were padded
    # (and transposed) once at layer construction.
    if (Bp, Kp) != (B, K):
        x = jnp.pad(x, ((0, Bp - B), (0, Kp - K)))

    if cfg["mode"] == "single":
        grid = (n_j, n_i)                    # N panels outer -> weight resident
        kernel = functools.partial(_fc_kernel_single, relu=relu)
        in_specs = [
            pl.BlockSpec((tm, Kp), lambda j, i: (i, 0)),   # x: streamed
            pl.BlockSpec((Kp, tn), lambda j, i: (0, j)),   # W: resident over i
            pl.BlockSpec((1, tn), lambda j, i: (0, j)),    # bias (f32)
        ]
        out_spec = pl.BlockSpec((tm, tn), lambda j, i: (i, j))
        scratch = []
        dims = ("parallel", "parallel")
        # Weight streamed from HBM exactly once; x re-read per N panel.
        bytes_accessed = (n_j * Bp * Kp * in_size + Kp * Np0 * in_size
                          + Np0 * 4 + Bp * Np0 * out_size)
    else:
        n_k = Kp // tk
        grid = (n_i, n_j, n_k)
        if out_is_f32:
            kernel = functools.partial(_fc_kernel_ktiled_f32, relu=relu)
            scratch = []
        else:
            kernel = functools.partial(_fc_kernel_ktiled_acc, relu=relu)
            scratch = [pltpu.VMEM((tm, tn), jnp.float32)]
        w_kwargs = {}
        if cfg["wbuf"] == 3:
            # Skinny-M, memory-bound regime: keep the HBM weight stream saturated.
            w_kwargs["pipeline_mode"] = pl.Buffered(3)
        in_specs = [
            pl.BlockSpec((tm, tk), lambda i, j, k: (i, k)),
            pl.BlockSpec((tk, tn), lambda i, j, k: (k, j), **w_kwargs),
            pl.BlockSpec((1, tn), lambda i, j, k: (0, j)),
        ]
        out_spec = pl.BlockSpec((tm, tn), lambda i, j, k: (i, j))
        dims = ("parallel", "parallel", "arbitrary")
        bytes_accessed = (n_j * Bp * Kp * in_size + n_i * Kp * Np0 * in_size
                          + Np0 * 4 + Bp * Np0 * out_size)

    # Scoped-VMEM limit: ~85-90% of physical VMEM max (~108 MiB on v5e/v6e,
    # ~54 MiB on v7x), never below the actual working set.
    vmem_limit = int(min(0.85 * vmem_bytes,
                         max(1.5 * cfg["need"], 32 * 1024 * 1024)))
    vmem_limit = max(vmem_limit, int(1.25 * cfg["need"]))
    vmem_limit = int(min(vmem_limit, 0.9 * vmem_bytes))

    cost = pl.CostEstimate(flops=2 * B * K * N, transcendentals=0,
                           bytes_accessed=int(bytes_accessed))

    out = pl.pallas_call(
        kernel,
        out_shape=jax.ShapeDtypeStruct((Bp, Np0), out_dtype),
        grid_spec=pltpu.PrefetchScalarGridSpec(
            num_scalar_prefetch=0,
            grid=grid,
            in_specs=in_specs,
            out_specs=out_spec,
            scratch_shapes=scratch,
        ),
        compiler_params=pltpu.CompilerParams(
            dimension_semantics=dims,
            vmem_limit_bytes=vmem_limit),
        cost_estimate=cost,
    )(x, w_t, b2d)

    if (Bp, Np0) != (B, N):
        out = out[:B, :N]
    return out


class FCLayer:
    """Pallas equivalent of the PyTorch FC module (Linear + optional ReLU).

    The (out_features, in_features) PyTorch weight is transposed to (K, N),
    zero-padded to tile multiples and cast to the compute dtype ONCE here, so
    per-call work is just the kernel (plus a small activation pad for ragged
    shapes).
    """

    def __init__(self, weight, bias, relu=True, compute_dtype=jnp.bfloat16,
                 k_block=None):
        weight = jnp.asarray(weight)
        bias = jnp.asarray(bias)
        N, K = weight.shape
        self.N, self.K = N, K
        self.relu = bool(relu)
        self.compute_dtype = None if compute_dtype is None else jnp.dtype(compute_dtype)
        self.k_block = k_block
        self.lane_n = 256 if N >= 256 else 128     # 256-wide MXU on v6e/v7x
        Kp = _round_up(K, 128)
        Np0 = _round_up(N, self.lane_n)

        w_t = weight.T                              # (K, N): native MXU feed
        if (Kp, Np0) != (K, N):
            w_t = jnp.pad(w_t, ((0, Kp - K), (0, Np0 - N)))
        if self.compute_dtype is not None:
            w_t = w_t.astype(self.compute_dtype)
        self.w_t = w_t

        b2d = bias.astype(jnp.float32).reshape(1, N)   # bias stays f32 (epilogue)
        if Np0 != N:
            b2d = jnp.pad(b2d, ((0, 0), (0, Np0 - N)))
        self.b2d = b2d

    def __call__(self, x):
        return _fc_apply(x, self.w_t, self.b2d, self.N, self.K,
                         relu=self.relu, compute_dtype=self.compute_dtype,
                         lane_n=self.lane_n, k_block=self.k_block)


def fc_forward(x, weight, bias, *, relu=True, compute_dtype=None, k_block=None):
    """One-shot functional form. For repeated use, build FCLayer once."""
    return FCLayer(weight, bias, relu=relu, compute_dtype=compute_dtype,
                   k_block=k_block)(x)


def reference_fc(x, weight, bias, relu=True):
    y = jnp.dot(x.astype(jnp.float32), weight.astype(jnp.float32).T) + bias
    return jnp.maximum(y, 0.0) if relu else y


if __name__ == "__main__":
    key = jax.random.PRNGKey(0)
    ks = jax.random.split(key, 10)

    # Case 1: exact f32 path (matches PyTorch FC: Linear + ReLU), single-pass
    # K-resident mode.
    batch, in_f, out_f = 8, 32, 64
    bound = 1.0 / (in_f ** 0.5)
    x = jax.random.normal(ks[0], (batch, in_f), dtype=jnp.float32)
    w = jax.random.uniform(ks[1], (out_f, in_f), minval=-bound, maxval=bound,
                           dtype=jnp.float32)
    b = jax.random.uniform(ks[2], (out_f,), minval=-bound, maxval=bound,
                           dtype=jnp.float32)
    layer = FCLayer(w, b, relu=True, compute_dtype=None)        # exact f32
    out = jax.block_until_ready(layer(x))
    ref = reference_fc(x, w, b, relu=True)
    assert out.shape == (batch, out_f)
    assert jnp.allclose(out, ref, atol=1e-5, rtol=1e-5), "mismatch (f32 relu)"

    # Case 2: default bf16-compute path, ragged shapes, relu=False.
    b2, k2, n2 = 5, 20, 33
    x2 = jax.random.normal(ks[3], (b2, k2), dtype=jnp.float32)
    w2 = jax.random.normal(ks[4], (n2, k2), dtype=jnp.float32) * 0.1
    bi2 = jax.random.normal(ks[5], (n2,), dtype=jnp.float32) * 0.1
    layer2 = FCLayer(w2, bi2, relu=False)            # compute_dtype=bf16 default
    out2 = jax.block_until_ready(layer2(x2))
    ref2 = reference_fc(x2, w2, bi2, relu=False)
    assert out2.shape == (b2, n2)
    assert jnp.allclose(out2, ref2, atol=3e-2, rtol=3e-2), "mismatch (bf16 ragged)"

    # Case 3: forced K-tiled path, f32 output -> direct o_ref accumulation
    # (+ triple-buffered weight stream).
    b3, k3, n3 = 8, 512, 64
    x3 = jax.random.normal(ks[6], (b3, k3), dtype=jnp.float32)
    w3 = jax.random.normal(ks[7], (n3, k3), dtype=jnp.float32) / 16.0
    bi3 = jnp.linspace(-0.5, 0.5, n3, dtype=jnp.float32)
    layer3 = FCLayer(w3, bi3, relu=True, compute_dtype=None, k_block=128)
    out3 = jax.block_until_ready(layer3(x3))
    ref3 = reference_fc(x3, w3, bi3, relu=True)
    assert out3.shape == (b3, n3)
    assert jnp.allclose(out3, ref3, atol=5e-3, rtol=5e-3), "mismatch (ktiled f32)"

    # Case 4: forced K-tiled path with bf16 input/output -> f32 scratch kernel.
    x4 = x3.astype(jnp.bfloat16)
    layer4 = FCLayer(w3, bi3, relu=False, compute_dtype=jnp.bfloat16, k_block=128)
    out4 = jax.block_until_ready(layer4(x4))
    ref4 = reference_fc(x4, w3, bi3, relu=False)
    assert out4.shape == (b3, n3) and out4.dtype == jnp.bfloat16
    assert jnp.allclose(out4.astype(jnp.float32), ref4, atol=5e-2, rtol=5e-2), \
        "mismatch (ktiled bf16)"

    print("KERNEL_OK")
</pallas_src>

<mosaic_0001>
module attributes {stable_mosaic.version = 11 : i64} {
  func.func @_fc_kernel_single(%arg0: i32, %arg1: i32, %arg2: memref<8x128xf32, #tpu.memory_space<vmem>>, %arg3: memref<128x128xf32, #tpu.memory_space<vmem>>, %arg4: memref<1x128xf32, #tpu.memory_space<vmem>>, %arg5: memref<8x128xf32, #tpu.memory_space<vmem>>) attributes {dimension_semantics = [#tpu.dimension_semantics<parallel>, #tpu.dimension_semantics<parallel>], iteration_bounds = array<i64: 1, 1>, scalar_prefetch = 0 : i64, scratch_operands = 0 : i64, tpu.core_type = #tpu.core_type<tc>, window_params = [{transform_indices = @transform_0, window_bounds = array<i64: 8, 128>}, {transform_indices = @transform_1, window_bounds = array<i64: 128, 128>}, {transform_indices = @transform_2, window_bounds = array<i64: 1, 128>}, {transform_indices = @transform_3, window_bounds = array<i64: 8, 128>}]} {
    %c0 = arith.constant 0 : index
    %c0_0 = arith.constant 0 : index
    %0 = vector.load %arg2[%c0, %c0_0] : memref<8x128xf32, #tpu.memory_space<vmem>>, vector<8x128xf32>
    %c0_1 = arith.constant 0 : index
    %c0_2 = arith.constant 0 : index
    %1 = vector.load %arg3[%c0_1, %c0_2] : memref<128x128xf32, #tpu.memory_space<vmem>>, vector<128x128xf32>
    %cst = arith.constant dense<0.000000e+00> : vector<8x128xf32>
    %2 = tpu.matmul %0, %1, %cst {dimension_numbers = #tpu.dot_dimension_numbers<[1], [0], [0], [1], [0, 0, 1, 1], [], []>} : vector<8x128xf32>, vector<128x128xf32>, vector<8x128xf32> -> vector<8x128xf32>
    %c0_3 = arith.constant 0 : index
    %c0_4 = arith.constant 0 : index
    %3 = vector.load %arg4[%c0_3, %c0_4] : memref<1x128xf32, #tpu.memory_space<vmem>>, vector<1x128xf32>
    %4 = vector.broadcast %3 : vector<1x128xf32> to vector<8x128xf32>
    %5 = arith.addf %2, %4 : vector<8x128xf32>
    %cst_5 = arith.constant 0.000000e+00 : f32
    %6 = vector.broadcast %cst_5 : f32 to vector<8x128xf32>
    %7 = arith.maximumf %5, %6 : vector<8x128xf32>
    %c0_6 = arith.constant 0 : index
    %c0_7 = arith.constant 0 : index
    %8 = vector.load %arg5[%c0_6, %c0_7] : memref<8x128xf32, #tpu.memory_space<vmem>>, vector<8x128xf32>
    tpu.vector_store %arg5[%c0_6, %c0_7], %7 {strides = array<i32>} : memref<8x128xf32, #tpu.memory_space<vmem>>, vector<8x128xf32>,
    return
  }
  func.func @transform_0(%arg0: i32, %arg1: i32) -> (i32, i32) {
    %c0_i32 = arith.constant 0 : i32
    %c0_i32_0 = arith.constant 0 : i32
    return %arg1, %c0_i32 : i32, i32
  }
  func.func @transform_1(%arg0: i32, %arg1: i32) -> (i32, i32) {
    %c0_i32 = arith.constant 0 : i32
    %c0_i32_0 = arith.constant 0 : i32
    return %c0_i32, %arg0 : i32, i32
  }
  func.func @transform_2(%arg0: i32, %arg1: i32) -> (i32, i32) {
    %c0_i32 = arith.constant 0 : i32
    %c0_i32_0 = arith.constant 0 : i32
    return %c0_i32, %arg0 : i32, i32
  }
  func.func @transform_3(%arg0: i32, %arg1: i32) -> (i32, i32) {
    %c0_i32 = arith.constant 0 : i32
    return %arg1, %arg0 : i32, i32
  }
}

</mosaic_0001>

<llo_original>
// kernel: tpu_custom_call.1
$region0: #{tpu_custom_call.1}
  #allocation0 [shape = 'u32[]', space=smem, size = 0x4, offset = 0x4, fixed_abs, tag = 'smem constant byte address 0x4 - core index']
  #allocation1 [shape = 'u32[144,128]{1,0:T(1,128)}', space=vmem, size = 0x12000, scoped, tag = 'internal scratch']
  %s0 = inlined_call_operand.hbm [shape: f32[8,128], index: 0, kind: input, shape index: {}]
  %s1 = inlined_call_operand.hbm [shape: f32[128,128], index: 1, kind: input, shape index: {}]
  %s2 = inlined_call_operand.vmem [shape: f32[1,128], index: 2, kind: input, shape index: {}]
  %s3 = inlined_call_operand.hbm [shape: f32[8,128], index: 3, kind: output, shape index: {}]
  %s4 = sld [smem:[#allocation0]]
  $region30: #{tpu_custom_call.1} parent=0
    _
  %s6 = ssub.s32 1, %s4
  %s7 = scalar_select 0, %s6, %s4
  $region1: #{tpu_custom_call.1} parent=0
    #allocation2 [shape = 'u8[4096]{0}', space=vmem, size = 0x1000, scoped, tag = 'input window, operand 0, single buffered']
    #allocation3 [shape = 's32[1]{0}', space=sflag, size = 0x4, scoped, tag = 'scoped memory for tpu_custom_call.1']
    #allocation4 [shape = 's32[1]{0}', space=sflag, size = 0x4, scoped, tag = 'scoped memory for tpu_custom_call.1']
    #allocation5 [shape = 'u8[65536]{0}', space=vmem, size = 0x10000, scoped, tag = 'input window, operand 1, single buffered']
    #allocation6 [shape = 's32[1]{0}', space=sflag, size = 0x4, scoped, tag = 'scoped memory for tpu_custom_call.1']
    #allocation7 [shape = 'u8[4096]{0}', space=vmem, size = 0x1000, scoped, tag = 'output window, operand 0, single buffered']
    %8 = vsyncpa [#allocation3], 0
    %9 = vsyncpa [#allocation6], 0
    %10 = vsyncpa [#allocation4], 0
    // Predicated region
    $region2: #{tpu_custom_call.1} parent=1 // pred_check
      _
    $region3: #{tpu_custom_call.1} parent=1 // pred_check_branch
      %12 = sbr.rel (0) target = $region5
    $region4: #{tpu_custom_call.1} parent=1 // pred_region
      %s14 = ssub.s32 128, 128
      %15 = vsyncadd [#allocation3], %s14
      %s17 = sshll.u32 [#allocation2], 4
      %s18 = int_to_ptr.vmem [resolvable:$true] %s17
      %20 = dma.hbm_to_vmem [thread:$0]  %s0, 128, %s18, [#allocation3]
    $region5: #{tpu_custom_call.1} parent=1 // pred_fallthru
      _
    // Predicated region
    $region6: #{tpu_custom_call.1} parent=1 // pred_check
      _
    $region7: #{tpu_custom_call.1} parent=1 // pred_check_branch
      %22 = sbr.rel (0) target = $region9
    $region8: #{tpu_custom_call.1} parent=1 // pred_region
      %s24 = ssub.s32 2048, 2048
      %25 = vsyncadd [#allocation6], %s24
      %s26 = sshll.u32 [#allocation5], 4
      %s27 = int_to_ptr.vmem [resolvable:$true] %s26
      %32 = dma.hbm_to_vmem [thread:$0]  %s1, 2048, %s27, [#allocation6], 128, 128, 8
    $region9: #{tpu_custom_call.1} parent=1 // pred_fallthru
      _
    // Predicated region
    $region10: #{tpu_custom_call.1} parent=1 // pred_check
      _
    $region11: #{tpu_custom_call.1} parent=1 // pred_check_branch
      %34 = sbr.rel (0) target = $region13
    $region12: #{tpu_custom_call.1} parent=1 // pred_region
      _
    $region13: #{tpu_custom_call.1} parent=1 // pred_fallthru
      _
    // Predicated region
    $region14: #{tpu_custom_call.1} parent=1 // pred_check
      _
    $region15: #{tpu_custom_call.1} parent=1 // pred_check_branch
      %36 = sbr.rel (0) target = $region17
    $region16: #{tpu_custom_call.1} parent=1 // pred_region
      %37 = dma.done [#allocation3], 128
    $region17: #{tpu_custom_call.1} parent=1 // pred_fallthru
      _
    // Predicated region
    $region18: #{tpu_custom_call.1} parent=1 // pred_check
      _
    $region19: #{tpu_custom_call.1} parent=1 // pred_check_branch
      %39 = sbr.rel (0) target = $region21
    $region20: #{tpu_custom_call.1} parent=1 // pred_region
      %40 = dma.done [#allocation6], 2048
    $region21: #{tpu_custom_call.1} parent=1 // pred_fallthru
      _
    %v41 = vld [vmem:[#allocation2] sm:$0xff]
    %v42 = vld [vmem:[#allocation5] sm:$0xff]
    %v43 = vld [vmem:[#allocation5 + $0x8] sm:$0xff]
    %v44 = vld [vmem:[#allocation5 + $0x10] sm:$0xff]
    %v45 = vld [vmem:[#allocation5 + $0x18] sm:$0xff]
    %v46 = vld [vmem:[#allocation5 + $0x20] sm:$0xff]
    %v47 = vld [vmem:[#allocation5 + $0x28] sm:$0xff]
    %v48 = vld [vmem:[#allocation5 + $0x30] sm:$0xff]
    %v49 = vld [vmem:[#allocation5 + $0x38] sm:$0xff]
    %v50 = vld [vmem:[#allocation5 + $0x40] sm:$0xff]
    %v51 = vld [vmem:[#allocation5 + $0x48] sm:$0xff]
    %v52 = vld [vmem:[#allocation5 + $0x50] sm:$0xff]
    %v53 = vld [vmem:[#allocation5 + $0x58] sm:$0xff]
    %v54 = vld [vmem:[#allocation5 + $0x60] sm:$0xff]
    %v55 = vld [vmem:[#allocation5 + $0x68] sm:$0xff]
    %v56 = vld [vmem:[#allocation5 + $0x70] sm:$0xff]
    %v57 = vld [vmem:[#allocation5 + $0x78] sm:$0xff]
    %v58 = vld [vmem:[%s2] sm:$0x1]
    %v60 = vlaneseq
    %v61 = vshrl.u32 %v60, 7
    %v62 = vsub.s32 0, %v61
    %v63 = vrot.slane %v58, %v62
    %65 = vmatprep.subr.mxu0 0.0
    %66 = vmatpush1.msra.mxu0 %v57
    %67 = vmatprep.subr.mxu0 0.0
    %68 = vmatpush1.msra.mxu0 %v56
    %69 = vmatprep.subr.mxu0 0.0
    %70 = vmatpush1.msra.mxu0 %v55
    %71 = vmatprep.subr.mxu0 0.0
    %72 = vmatpush1.msra.mxu0 %v54
    %73 = vmatprep.subr.mxu0 0.0
    %74 = vmatpush1.msra.mxu0 %v53
    %75 = vmatprep.subr.mxu0 0.0
    %76 = vmatpush1.msra.mxu0 %v52
    %77 = vmatprep.subr.mxu0 0.0
    %78 = vmatpush1.msra.mxu0 %v51
    %79 = vmatprep.subr.mxu0 0.0
    %80 = vmatpush1.msra.mxu0 %v50
    %81 = vmatprep.subr.mxu0 0.0
    %82 = vmatpush1.msra.mxu0 %v49
    %83 = vmatprep.subr.mxu0 0.0
    %84 = vmatpush1.msra.mxu0 %v48
    %85 = vmatprep.subr.mxu0 0.0
    %86 = vmatpush1.msra.mxu0 %v47
    %87 = vmatprep.subr.mxu0 0.0
    %88 = vmatpush1.msra.mxu0 %v46
    %89 = vmatprep.subr.mxu0 0.0
    %90 = vmatpush1.msra.mxu0 %v45
    %91 = vmatprep.subr.mxu0 0.0
    %92 = vmatpush1.msra.mxu0 %v44
    %93 = vmatprep.subr.mxu0 0.0
    %94 = vmatpush1.msra.mxu0 %v43
    %95 = vmatprep.subr.mxu0 0.0
    %96 = vmatpush1.msra.mxu0 %v42
    %97 = vmatprep.subr.mxu0 0.0
    %98 = vmatpush2.msra.mxu0 0.0
    %99 = vmatprep.subr.mxu0 0.0
    %100 = vmatpush2.msra.mxu0 0.0
    %101 = vmatprep.subr.mxu0 0.0
    %102 = vmatpush2.msra.mxu0 0.0
    %103 = vmatprep.subr.mxu0 0.0
    %104 = vmatpush2.msra.mxu0 0.0
    %105 = vmatprep.subr.mxu0 0.0
    %106 = vmatpush2.msra.mxu0 0.0
    %107 = vmatprep.subr.mxu0 0.0
    %108 = vmatpush2.msra.mxu0 0.0
    %109 = vmatprep.subr.mxu0 0.0
    %110 = vmatpush2.msra.mxu0 0.0
    %111 = vmatprep.subr.mxu0 0.0
    %112 = vmatpush2.msra.mxu0 0.0
    %113 = vmatprep.subr.mxu0 0.0
    %114 = vmatpush2.msra.mxu0 0.0
    %115 = vmatprep.subr.mxu0 0.0
    %116 = vmatpush2.msra.mxu0 0.0
    %117 = vmatprep.subr.mxu0 0.0
    %118 = vmatpush2.msra.mxu0 0.0
    %119 = vmatprep.subr.mxu0 0.0
    %120 = vmatpush2.msra.mxu0 0.0
    %121 = vmatprep.subr.mxu0 0.0
    %122 = vmatpush2.msra.mxu0 0.0
    %123 = vmatprep.subr.mxu0 0.0
    %124 = vmatpush2.msra.mxu0 0.0
    %125 = vmatprep.subr.mxu0 0.0
    %126 = vmatpush2.msra.mxu0 0.0
    %127 = vmatprep.subr.mxu0 0.0
    %128 = vmatpush2.msra.mxu0 0.0
    %129 = vmatprep.mubr.f32.mxu0 0.0
    %130 = vmatmul.mubr.f32.gmra.mxu0 %v41
    %v131 = vpop.f32.mrf.mxu0
    %v132 = vadd.f32 %v63, %v131
    %v133 = vpop.f32.mrf.mxu0
    %134 = vdwg.mxu0
    %v135 = vmax.f32 %v132, 0.0
    %136 = vst [vmem:[#allocation7] sm:$0xff] %v135
    // Predicated region
    $region22: #{tpu_custom_call.1} parent=1 // pred_check
      _
    $region23: #{tpu_custom_call.1} parent=1 // pred_check_branch
      %138 = sbr.rel (0) target = $region25
    $region24: #{tpu_custom_call.1} parent=1 // pred_region
      %s140 = ssub.s32 128, 128
      %141 = vsyncadd [#allocation4], %s140
      %s143 = sshll.u32 [#allocation7], 4
      %s144 = int_to_ptr.vmem [resolvable:$true] %s143
      %146 = dma.vmem_to_hbm [thread:$0]  %s144, 128, %s3, [#allocation4]
    $region25: #{tpu_custom_call.1} parent=1 // pred_fallthru
      _
    // Predicated region
    $region26: #{tpu_custom_call.1} parent=1 // pred_check
      _
    $region27: #{tpu_custom_call.1} parent=1 // pred_check_branch
      %148 = sbr.rel (0) target = $region29
    $region28: #{tpu_custom_call.1} parent=1 // pred_region
      %149 = dma.done [#allocation4], 128
    $region29: #{tpu_custom_call.1} parent=1 // pred_fallthru
      _
    %150 = vsyncpa [#allocation3], 1
    %151 = vsyncpa [#allocation6], 1
    %152 = vsyncpa [#allocation4], 1

</llo_original>
